<compile_context>
chip_gen: v7x
topology: tpu7x:2x2x1
jax: 0.10.0
libtpu: 0.0.40
codegen_flags: <defaults>
</compile_context>

<pallas_src>
import jax
import jax.numpy as jnp
from jax.experimental import pallas as pl
from jax.experimental.pallas import tpu as pltpu


def _round_up(x, m):
    return (x + m - 1) // m * m


def c1_forward(x, params, eps=1e-5):
    """x: (B, c1, H, W) float32. params: raw conv/BN params (eval mode)."""
    w1, g1, bb1, m1, v1, w2, g2, bb2, m2, v2 = params
    B, Cin, H, W = x.shape
    Cout = w1.shape[0]

    # ---- gutter-padded, lane-dense layout -----------------------------------
    # Image lives in rows 0..H-1, cols 0..W-1 of an (H+1, W+1) zero canvas;
    # flattened, every out-of-image tap read lands on a zero lane.
    Wp, Hp = W + 1, H + 1
    Lp = Hp * Wp
    Lpad = _round_up(Lp, 128)

    canvas = jnp.zeros((B, Cin + 1, Hp, Wp), jnp.float32)
    canvas = canvas.at[:, :Cin, :H, :W].set(x)
    canvas = canvas.at[:, Cin, :H, :W].set(1.0)       # ones channel -> cv1 bias
    x_pad = canvas.reshape(B, Cin + 1, Lp)
    x_pad = jnp.pad(x_pad, ((0, 0), (0, 0), (0, Lpad - Lp)))
    # batch concatenated along lanes (b-major), bf16 operands for the MXU
    x_lanes = jnp.transpose(x_pad, (1, 0, 2)).reshape(Cin + 1, B * Lpad)
    x_lanes = x_lanes.astype(jnp.bfloat16)

    # ---- host-side folding: BN (eval) into conv weights ---------------------
    s1 = g1 / jnp.sqrt(v1 + eps)
    w1_eff = w1[:, :, 0, 0] * s1[:, None]                       # (Cout, Cin)
    b1 = bb1 - m1 * s1                                          # (Cout,)
    w1_aug = jnp.concatenate([w1_eff, b1[:, None]], axis=1)     # (Cout, Cin+1)
    w1_aug = w1_aug.astype(jnp.bfloat16)

    s2 = g2 / jnp.sqrt(v2 + eps)
    w2_eff = w2 * s2[:, None, None, None]                       # (Cout, Cout, 3, 3)
    # column order (kh, kw, ci) matches the in-kernel tap stacking order
    w2_cat = jnp.transpose(w2_eff, (0, 2, 3, 1)).reshape(Cout, 9 * Cout)
    w2_cat = w2_cat.astype(jnp.bfloat16)
    b2_col = (bb2 - m2 * s2)[:, None].astype(jnp.float32)       # (Cout, 1)

    # ---- grid: groups of whole images along the lane axis -------------------
    bb = B if B * Lpad <= 8192 else 1        # batches per grid step
    grid = (B // bb,)
    lanes = bb * Lpad

    # static per-tap lane shifts in the padded layout
    shifts = []
    for kh in range(3):
        for kw in range(3):
            off = (kh - 1) * Wp + (kw - 1)
            shifts.append((-off) % lanes)

    def kernel(x_ref, w1_ref, w2_ref, b2_ref, o_ref):
        xb = x_ref[...]                                        # (Cin+1, lanes) bf16
        # cv1: 1x1 conv + folded BN bias (ones channel), SiLU in f32.
        y32 = jnp.dot(w1_ref[...], xb, preferred_element_type=jnp.float32)
        y32 = y32 * jax.nn.sigmoid(y32)                        # exactly 0 in gutters
        y16 = y32.astype(jnp.bfloat16)

        # m[0]: 3x3 "same" conv as ONE fused MXU matmul over a stacked slab of
        # the 9 shifted copies of y (gutter zeros stand in for the conv pad).
        pieces = []
        for s in shifts:
            if s == 0:
                pieces.append(y16)                             # center tap
            else:
                pieces.append(
                    pltpu.roll(y32, shift=s, axis=1).astype(jnp.bfloat16))
        slab = jnp.concatenate(pieces, axis=0)                 # (9*Cout, lanes)

        z32 = jnp.dot(w2_ref[...], slab,
                      preferred_element_type=jnp.float32) + b2_ref[...]
        z32 = z32 * jax.nn.sigmoid(z32)                        # SiLU

        o_ref[...] = (z32 + y32).astype(o_ref.dtype)           # residual add

    out2d = pl.pallas_call(
        kernel,
        out_shape=jax.ShapeDtypeStruct((Cout, B * Lpad), jnp.float32),
        grid_spec=pltpu.PrefetchScalarGridSpec(
            num_scalar_prefetch=0,
            grid=grid,
            in_specs=[
                pl.BlockSpec((Cin + 1, lanes), lambda g: (0, g)),   # x (lane-concat)
                pl.BlockSpec((Cout, Cin + 1), lambda g: (0, 0)),    # cv1 w (+bias col)
                pl.BlockSpec((Cout, 9 * Cout), lambda g: (0, 0)),   # fused 3x3 taps
                pl.BlockSpec((Cout, 1), lambda g: (0, 0)),          # m bias col
            ],
            out_specs=pl.BlockSpec((Cout, lanes), lambda g: (0, g)),
        ),
        compiler_params=pltpu.CompilerParams(
            dimension_semantics=("parallel",),
            vmem_limit_bytes=32 * 1024 * 1024,
        ),
    )(x_lanes, w1_aug, w2_cat, b2_col)

    # undo lane layout: (Cout, B*Lpad) -> (B, Cout, H, W)
    out = out2d.reshape(Cout, B, Lpad).transpose(1, 0, 2)
    out = out[:, :, : H * Wp].reshape(B, Cout, H, Wp)[:, :, :, :W]
    return out


def c1_ref(x, params, eps=1e-5):
    """Pure-JAX reference mirroring the PyTorch C1 forward (eval mode)."""
    w1, g1, bb1, m1, v1, w2, g2, bb2, m2, v2 = params

    def conv_bn_silu(inp, w, gamma, beta, mean, var, pad):
        y = jax.lax.conv_general_dilated(
            inp, w, window_strides=(1, 1),
            padding=[(pad, pad), (pad, pad)],
            dimension_numbers=("NCHW", "OIHW", "NCHW"),
            precision=jax.lax.Precision.HIGHEST)
        s = gamma / jnp.sqrt(var + eps)
        y = y * s[None, :, None, None] + (beta - mean * s)[None, :, None, None]
        return y * jax.nn.sigmoid(y)

    y = conv_bn_silu(x, w1, g1, bb1, m1, v1, pad=0)   # cv1
    z = conv_bn_silu(y, w2, g2, bb2, m2, v2, pad=1)   # m[0]
    return z + y


def init_params(key, c1, c2):
    """Deterministic synthetic weights matching C1.__init__ shapes (n=1)."""
    ks = jax.random.split(key, 10)
    w1 = 0.1 * jax.random.normal(ks[0], (c2, c1, 1, 1), jnp.float32)
    g1 = 1.0 + 0.1 * jax.random.normal(ks[1], (c2,), jnp.float32)
    b1 = 0.1 * jax.random.normal(ks[2], (c2,), jnp.float32)
    m1 = 0.1 * jax.random.normal(ks[3], (c2,), jnp.float32)
    v1 = 0.5 + jax.random.uniform(ks[4], (c2,), jnp.float32)
    w2 = 0.1 * jax.random.normal(ks[5], (c2, c2, 3, 3), jnp.float32)
    g2 = 1.0 + 0.1 * jax.random.normal(ks[6], (c2,), jnp.float32)
    b2 = 0.1 * jax.random.normal(ks[7], (c2,), jnp.float32)
    m2 = 0.1 * jax.random.normal(ks[8], (c2,), jnp.float32)
    v2 = 0.5 + jax.random.uniform(ks[9], (c2,), jnp.float32)
    return (w1, g1, b1, m1, v1, w2, g2, b2, m2, v2)


if __name__ == "__main__":
    B, C_in, C_out, H, W = 2, 4, 8, 16, 16
    key = jax.random.PRNGKey(0)
    kx, kp = jax.random.split(key)
    x = jax.random.normal(kx, (B, C_in, H, W), jnp.float32)
    params = init_params(kp, C_in, C_out)

    out = jax.block_until_ready(c1_forward(x, params))
    ref = c1_ref(x, params)

    assert out.shape == (B, C_out, H, W)
    # bf16 MXU operands (f32 accumulation) -> relaxed tolerance vs f32 reference
    assert jnp.allclose(out, ref, atol=2e-2, rtol=2e-2), "mismatch vs reference"

    print("KERNEL_OK")
</pallas_src>

<mosaic_0001>
module attributes {stable_mosaic.version = 11 : i64} {
  func.func @kernel(%arg0: i32, %arg1: memref<5x768xbf16, #tpu.memory_space<vmem>>, %arg2: memref<8x5xbf16, #tpu.memory_space<vmem>>, %arg3: memref<8x72xbf16, #tpu.memory_space<vmem>>, %arg4: memref<8x1xf32, #tpu.memory_space<vmem>>, %arg5: memref<8x768xf32, #tpu.memory_space<vmem>>) attributes {dimension_semantics = [#tpu.dimension_semantics<parallel>], iteration_bounds = array<i64: 1>, scalar_prefetch = 0 : i64, scratch_operands = 0 : i64, tpu.core_type = #tpu.core_type<tc>, window_params = [{transform_indices = @transform_0, window_bounds = array<i64: 5, 768>}, {pipeline_mode = #tpu.pipeline_mode<synchronous>, transform_indices = @transform_1, window_bounds = array<i64: 8, 5>}, {pipeline_mode = #tpu.pipeline_mode<synchronous>, transform_indices = @transform_2, window_bounds = array<i64: 8, 72>}, {pipeline_mode = #tpu.pipeline_mode<synchronous>, transform_indices = @transform_3, window_bounds = array<i64: 8, 1>}, {transform_indices = @transform_4, window_bounds = array<i64: 8, 768>}]} {
    %c0 = arith.constant 0 : index
    %c0_0 = arith.constant 0 : index
    %0 = vector.load %arg1[%c0, %c0_0] : memref<5x768xbf16, #tpu.memory_space<vmem>>, vector<5x768xbf16>
    %c0_1 = arith.constant 0 : index
    %c0_2 = arith.constant 0 : index
    %1 = vector.load %arg2[%c0_1, %c0_2] : memref<8x5xbf16, #tpu.memory_space<vmem>>, vector<8x5xbf16>
    %cst = arith.constant dense<0.000000e+00> : vector<8x768xf32>
    %2 = tpu.matmul %1, %0, %cst {dimension_numbers = #tpu.dot_dimension_numbers<[1], [0], [0], [1], [0, 0, 1, 1], [], []>} : vector<8x5xbf16>, vector<5x768xbf16>, vector<8x768xf32> -> vector<8x768xf32>
    %3 = arith.negf %2 : vector<8x768xf32>
    %4 = math.exp %3 : vector<8x768xf32>
    %cst_3 = arith.constant 1.000000e+00 : f32
    %5 = vector.broadcast %cst_3 : f32 to vector<8x768xf32>
    %6 = arith.addf %5, %4 : vector<8x768xf32>
    %7 = arith.divf %5, %6 : vector<8x768xf32>
    %8 = arith.mulf %2, %7 : vector<8x768xf32>
    %9 = arith.truncf %8 : vector<8x768xf32> to vector<8x768xbf16>
    %c18_i32 = arith.constant 18 : i32
    %10 = tpu.dynamic_rotate %8 by %c18_i32 dim 1 : vector<8x768xf32>, i32 -> vector<8x768xf32>
    %11 = arith.truncf %10 : vector<8x768xf32> to vector<8x768xbf16>
    %c17_i32 = arith.constant 17 : i32
    %12 = tpu.dynamic_rotate %8 by %c17_i32 dim 1 : vector<8x768xf32>, i32 -> vector<8x768xf32>
    %13 = arith.truncf %12 : vector<8x768xf32> to vector<8x768xbf16>
    %c16_i32 = arith.constant 16 : i32
    %14 = tpu.dynamic_rotate %8 by %c16_i32 dim 1 : vector<8x768xf32>, i32 -> vector<8x768xf32>
    %15 = arith.truncf %14 : vector<8x768xf32> to vector<8x768xbf16>
    %c1_i32 = arith.constant 1 : i32
    %16 = tpu.dynamic_rotate %8 by %c1_i32 dim 1 : vector<8x768xf32>, i32 -> vector<8x768xf32>
    %17 = arith.truncf %16 : vector<8x768xf32> to vector<8x768xbf16>
    %c767_i32 = arith.constant 767 : i32
    %18 = tpu.dynamic_rotate %8 by %c767_i32 dim 1 : vector<8x768xf32>, i32 -> vector<8x768xf32>
    %19 = arith.truncf %18 : vector<8x768xf32> to vector<8x768xbf16>
    %c752_i32 = arith.constant 752 : i32
    %20 = tpu.dynamic_rotate %8 by %c752_i32 dim 1 : vector<8x768xf32>, i32 -> vector<8x768xf32>
    %21 = arith.truncf %20 : vector<8x768xf32> to vector<8x768xbf16>
    %c751_i32 = arith.constant 751 : i32
    %22 = tpu.dynamic_rotate %8 by %c751_i32 dim 1 : vector<8x768xf32>, i32 -> vector<8x768xf32>
    %23 = arith.truncf %22 : vector<8x768xf32> to vector<8x768xbf16>
    %c750_i32 = arith.constant 750 : i32
    %24 = tpu.dynamic_rotate %8 by %c750_i32 dim 1 : vector<8x768xf32>, i32 -> vector<8x768xf32>
    %25 = arith.truncf %24 : vector<8x768xf32> to vector<8x768xbf16>
    %26 = tpu.concatenate %11, %13, %15, %17, %9, %19, %21, %23, %25 in 0 : vector<8x768xbf16>, vector<8x768xbf16>, vector<8x768xbf16>, vector<8x768xbf16>, vector<8x768xbf16>, vector<8x768xbf16>, vector<8x768xbf16>, vector<8x768xbf16>, vector<8x768xbf16> -> vector<72x768xbf16>
    %c0_4 = arith.constant 0 : index
    %c0_5 = arith.constant 0 : index
    %27 = vector.load %arg3[%c0_4, %c0_5] : memref<8x72xbf16, #tpu.memory_space<vmem>>, vector<8x72xbf16>
    %cst_6 = arith.constant dense<0.000000e+00> : vector<8x768xf32>
    %28 = tpu.matmul %27, %26, %cst_6 {dimension_numbers = #tpu.dot_dimension_numbers<[1], [0], [0], [1], [0, 0, 1, 1], [], []>} : vector<8x72xbf16>, vector<72x768xbf16>, vector<8x768xf32> -> vector<8x768xf32>
    %c0_7 = arith.constant 0 : index
    %c0_8 = arith.constant 0 : index
    %29 = vector.load %arg4[%c0_7, %c0_8] : memref<8x1xf32, #tpu.memory_space<vmem>>, vector<8x1xf32>
    %30 = vector.broadcast %29 : vector<8x1xf32> to vector<8x768xf32>
    %31 = arith.addf %28, %30 : vector<8x768xf32>
    %32 = arith.negf %31 : vector<8x768xf32>
    %33 = math.exp %32 : vector<8x768xf32>
    %cst_9 = arith.constant 1.000000e+00 : f32
    %34 = vector.broadcast %cst_9 : f32 to vector<8x768xf32>
    %35 = arith.addf %34, %33 : vector<8x768xf32>
    %36 = arith.divf %34, %35 : vector<8x768xf32>
    %37 = arith.mulf %31, %36 : vector<8x768xf32>
    %38 = arith.addf %37, %8 : vector<8x768xf32>
    %c0_10 = arith.constant 0 : index
    %c0_11 = arith.constant 0 : index
    %39 = vector.load %arg5[%c0_10, %c0_11] : memref<8x768xf32, #tpu.memory_space<vmem>>, vector<8x768xf32>
    tpu.vector_store %arg5[%c0_10, %c0_11], %38 {strides = array<i32>} : memref<8x768xf32, #tpu.memory_space<vmem>>, vector<8x768xf32>,
    return
  }
  func.func @transform_0(%arg0: i32) -> (i32, i32) {
    %c0_i32 = arith.constant 0 : i32
    %c0_i32_0 = arith.constant 0 : i32
    return %c0_i32, %arg0 : i32, i32
  }
  func.func @transform_1(%arg0: i32) -> (i32, i32) {
    %c0_i32 = arith.constant 0 : i32
    %c0_i32_0 = arith.constant 0 : i32
    %c0_i32_1 = arith.constant 0 : i32
    return %c0_i32, %c0_i32_0 : i32, i32
  }
  func.func @transform_2(%arg0: i32) -> (i32, i32) {
    %c0_i32 = arith.constant 0 : i32
    %c0_i32_0 = arith.constant 0 : i32
    %c0_i32_1 = arith.constant 0 : i32
    return %c0_i32, %c0_i32_0 : i32, i32
  }
  func.func @transform_3(%arg0: i32) -> (i32, i32) {
    %c0_i32 = arith.constant 0 : i32
    %c0_i32_0 = arith.constant 0 : i32
    %c0_i32_1 = arith.constant 0 : i32
    return %c0_i32, %c0_i32_0 : i32, i32
  }
  func.func @transform_4(%arg0: i32) -> (i32, i32) {
    %c0_i32 = arith.constant 0 : i32
    %c0_i32_0 = arith.constant 0 : i32
    return %c0_i32, %arg0 : i32, i32
  }
}

</mosaic_0001>

<llo_original>
// kernel: tpu_custom_call.1
$region0: #{tpu_custom_call.1}
  #allocation0 [shape = 'u32[]', space=smem, size = 0x4, offset = 0x4, fixed_abs, tag = 'smem constant byte address 0x4 - core index']
  #allocation1 [shape = 'u32[144,128]{1,0:T(1,128)}', space=vmem, size = 0x12000, scoped, tag = 'internal scratch']
  %s0 = inlined_call_operand.hbm [shape: bf16[5,768], index: 0, kind: input, shape index: {}]
  %s1 = inlined_call_operand.vmem [shape: bf16[8,5], index: 1, kind: input, shape index: {}]
  %s2 = inlined_call_operand.vmem [shape: bf16[8,72], index: 2, kind: input, shape index: {}]
  %s3 = inlined_call_operand.vmem [shape: f32[8,1], index: 3, kind: input, shape index: {}]
  %s4 = inlined_call_operand.hbm [shape: f32[8,768], index: 4, kind: output, shape index: {}]
  %s5 = sld [smem:[#allocation0]]
  $region30: #{tpu_custom_call.1} parent=0
    _
  %s7 = ssub.s32 1, %s5
  %s8 = scalar_select 0, %s7, %s5
  $region1: #{tpu_custom_call.1} parent=0
    #allocation2 [shape = 'u8[12288]{0}', space=vmem, size = 0x3000, scoped, tag = 'input window, operand 0, single buffered']
    #allocation3 [shape = 's32[1]{0}', space=sflag, size = 0x4, scoped, tag = 'scoped memory for tpu_custom_call.1']
    #allocation4 [shape = 's32[1]{0}', space=sflag, size = 0x4, scoped, tag = 'scoped memory for tpu_custom_call.1']
    #allocation5 [shape = 'u8[24576]{0}', space=vmem, size = 0x6000, scoped, tag = 'output window, operand 0, single buffered']
    %9 = vsyncpa [#allocation3], 0
    %10 = vsyncpa [#allocation4], 0
    // Predicated region
    $region2: #{tpu_custom_call.1} parent=1 // pred_check
      _
    $region3: #{tpu_custom_call.1} parent=1 // pred_check_branch
      %12 = sbr.rel (0) target = $region5
    $region4: #{tpu_custom_call.1} parent=1 // pred_region
      %s14 = ssub.s32 384, 384
      %15 = vsyncadd [#allocation3], %s14
      %s17 = sshll.u32 [#allocation2], 4
      %s18 = int_to_ptr.vmem [resolvable:$true] %s17
      %20 = dma.hbm_to_vmem [thread:$0]  %s0, 384, %s18, [#allocation3]
    $region5: #{tpu_custom_call.1} parent=1 // pred_fallthru
      _
    // Predicated region
    $region6: #{tpu_custom_call.1} parent=1 // pred_check
      _
    $region7: #{tpu_custom_call.1} parent=1 // pred_check_branch
      %22 = sbr.rel (0) target = $region9
    $region8: #{tpu_custom_call.1} parent=1 // pred_region
      _
    $region9: #{tpu_custom_call.1} parent=1 // pred_fallthru
      _
    // Predicated region
    $region10: #{tpu_custom_call.1} parent=1 // pred_check
      _
    $region11: #{tpu_custom_call.1} parent=1 // pred_check_branch
      %24 = sbr.rel (0) target = $region13
    $region12: #{tpu_custom_call.1} parent=1 // pred_region
      _
    $region13: #{tpu_custom_call.1} parent=1 // pred_fallthru
      _
    // Predicated region
    $region14: #{tpu_custom_call.1} parent=1 // pred_check
      _
    $region15: #{tpu_custom_call.1} parent=1 // pred_check_branch
      %26 = sbr.rel (0) target = $region17
    $region16: #{tpu_custom_call.1} parent=1 // pred_region
      _
    $region17: #{tpu_custom_call.1} parent=1 // pred_fallthru
      _
    // Predicated region
    $region18: #{tpu_custom_call.1} parent=1 // pred_check
      _
    $region19: #{tpu_custom_call.1} parent=1 // pred_check_branch
      %28 = sbr.rel (0) target = $region21
    $region20: #{tpu_custom_call.1} parent=1 // pred_region
      %29 = dma.done [#allocation3], 384
    $region21: #{tpu_custom_call.1} parent=1 // pred_fallthru
      _
    %v31 = vld [vmem:[#allocation2] sm:$0x77]
    %v32 = vld [vmem:[#allocation2 + $0x8] sm:$0x77]
    %v33 = vld [vmem:[#allocation2 + $0x10] sm:$0x77]
    %v34 = vld [vmem:[%s1] sm:$0xf]
    %v38 = vunpack.c.l.b16 %v31
    %v39 = vunpack.c.h.b16 %v31
    %v40 = vunpack.c.l.b16 %v32
    %v41 = vunpack.c.h.b16 %v32
    %v42 = vunpack.c.l.b16 %v33
    %v43 = vunpack.c.h.b16 %v33
    %v44 = vpack.c.b16 %v38, %v38
    %v45 = vpack.c.b16 %v39, %v39
    %v46 = vpack.c.b16 %v40, %v40
    %v47 = vpack.c.b16 %v41, %v41
    %v48 = vpack.c.b16 %v42, %v42
    %v49 = vpack.c.b16 %v43, %v43
    %vm50 = vcmask 39936
    %v52 = vsel %vm50, %v34, 0
    %vm54 = vcmask 1041408
    %vm55 = vcmask 1042432
    %v56 = vsel %vm54, 4294967295, 65535
    %v57 = vsel %vm55, %v56, 0
    %v59 = vand.u32 %v44, %v57
    %v62 = vand.u32 %v45, %v57
    %v65 = vand.u32 %v46, %v57
    %v68 = vand.u32 %v47, %v57
    %v71 = vand.u32 %v48, %v57
    %v74 = vand.u32 %v49, %v57
    %76 = vmatprep.subr.bf16.mxu0 %v62
    %77 = vmatpush1.bf16.msra.mxu0 %v59
    %78 = vmatprep.subr.bf16.mxu0 0
    %79 = vmatpush1.bf16.msra.mxu0 0
    %80 = vmatprep.subr.bf16.mxu0 0
    %81 = vmatpush1.bf16.msra.mxu0 0
    %82 = vmatprep.subr.bf16.mxu0 0
    %83 = vmatpush1.bf16.msra.mxu0 0
    %84 = vmatprep.subr.bf16.mxu0 0
    %85 = vmatpush1.bf16.msra.mxu0 0
    %86 = vmatprep.subr.bf16.mxu0 0
    %87 = vmatpush1.bf16.msra.mxu0 0
    %88 = vmatprep.subr.bf16.mxu0 0
    %89 = vmatpush1.bf16.msra.mxu0 0
    %90 = vmatprep.subr.bf16.mxu0 0
    %91 = vmatpush1.bf16.msra.mxu0 0
    %92 = vmatprep.subr.bf16.mxu0 0
    %93 = vmatpush1.bf16.msra.mxu0 0
    %94 = vmatprep.subr.bf16.mxu0 0
    %95 = vmatpush1.bf16.msra.mxu0 0
    %96 = vmatprep.subr.bf16.mxu0 0
    %97 = vmatpush1.bf16.msra.mxu0 0
    %98 = vmatprep.subr.bf16.mxu0 0
    %99 = vmatpush1.bf16.msra.mxu0 0
    %100 = vmatprep.subr.bf16.mxu0 0
    %101 = vmatpush1.bf16.msra.mxu0 0
    %102 = vmatprep.subr.bf16.mxu0 0
    %103 = vmatpush1.bf16.msra.mxu0 0
    %104 = vmatprep.subr.bf16.mxu0 0
    %105 = vmatpush1.bf16.msra.mxu0 0
    %106 = vmatprep.subr.bf16.mxu0 0
    %107 = vmatpush1.bf16.msra.mxu0 0
    %108 = vmatprep.mubr.bf16.mxu0 0
    %109 = vmatmul.mubr.bf16.gmra.mrb[0].mxu0 %v52
    %v110 = vpop.f32.mrb[0].mxu0
    %v111 = vadd.f32 0.0, %v110
    %v112 = vpop.f32.mrb[0].mxu0
    %v113 = vadd.f32 0.0, %v112
    %v114 = vpop.f32.mrb[0].mxu0
    %v115 = vpop.f32.mrb[0].mxu0
    %116 = vdwg.mxu0
    %117 = vmatprep.subr.bf16.mxu0 %v68
    %118 = vmatpush1.bf16.msra.mxu0 %v65
    %119 = vmatprep.subr.bf16.mxu0 0
    %120 = vmatpush1.bf16.msra.mxu0 0
    %121 = vmatprep.subr.bf16.mxu0 0
    %122 = vmatpush1.bf16.msra.mxu0 0
    %123 = vmatprep.subr.bf16.mxu0 0
    %124 = vmatpush1.bf16.msra.mxu0 0
    %125 = vmatprep.subr.bf16.mxu0 0
    %126 = vmatpush1.bf16.msra.mxu0 0
    %127 = vmatprep.subr.bf16.mxu0 0
    %128 = vmatpush1.bf16.msra.mxu0 0
    %129 = vmatprep.subr.bf16.mxu0 0
    %130 = vmatpush1.bf16.msra.mxu0 0
    %131 = vmatprep.subr.bf16.mxu0 0
    %132 = vmatpush1.bf16.msra.mxu0 0
    %133 = vmatprep.subr.bf16.mxu0 0
    %134 = vmatpush1.bf16.msra.mxu0 0
    %135 = vmatprep.subr.bf16.mxu0 0
    %136 = vmatpush1.bf16.msra.mxu0 0
    %137 = vmatprep.subr.bf16.mxu0 0
    %138 = vmatpush1.bf16.msra.mxu0 0
    %139 = vmatprep.subr.bf16.mxu0 0
    %140 = vmatpush1.bf16.msra.mxu0 0
    %141 = vmatprep.subr.bf16.mxu0 0
    %142 = vmatpush1.bf16.msra.mxu0 0
    %143 = vmatprep.subr.bf16.mxu0 0
    %144 = vmatpush1.bf16.msra.mxu0 0
    %145 = vmatprep.subr.bf16.mxu0 0
    %146 = vmatpush1.bf16.msra.mxu0 0
    %147 = vmatprep.subr.bf16.mxu0 0
    %148 = vmatpush1.bf16.msra.mxu0 0
    %149 = vmatprep.mubr.bf16.mxu0 0
    %150 = vmatmul.mubr.bf16.gmra.mrb[0].mxu0 %v52
    %v151 = vpop.f32.mrb[0].mxu0
    %v152 = vadd.f32 0.0, %v151
    %v153 = vpop.f32.mrb[0].mxu0
    %v154 = vadd.f32 0.0, %v153
    %v155 = vpop.f32.mrb[0].mxu0
    %v156 = vpop.f32.mrb[0].mxu0
    %157 = vdwg.mxu0
    %158 = vmatprep.subr.bf16.mxu0 %v74
    %159 = vmatpush1.bf16.msra.mxu0 %v71
    %160 = vmatprep.subr.bf16.mxu0 0
    %161 = vmatpush1.bf16.msra.mxu0 0
    %162 = vmatprep.subr.bf16.mxu0 0
    %163 = vmatpush1.bf16.msra.mxu0 0
    %164 = vmatprep.subr.bf16.mxu0 0
    %165 = vmatpush1.bf16.msra.mxu0 0
    %166 = vmatprep.subr.bf16.mxu0 0
    %167 = vmatpush1.bf16.msra.mxu0 0
    %168 = vmatprep.subr.bf16.mxu0 0
    %169 = vmatpush1.bf16.msra.mxu0 0
    %170 = vmatprep.subr.bf16.mxu0 0
    %171 = vmatpush1.bf16.msra.mxu0 0
    %172 = vmatprep.subr.bf16.mxu0 0
    %173 = vmatpush1.bf16.msra.mxu0 0
    %174 = vmatprep.subr.bf16.mxu0 0
    %175 = vmatpush1.bf16.msra.mxu0 0
    %176 = vmatprep.subr.bf16.mxu0 0
    %177 = vmatpush1.bf16.msra.mxu0 0
    %178 = vmatprep.subr.bf16.mxu0 0
    %179 = vmatpush1.bf16.msra.mxu0 0
    %180 = vmatprep.subr.bf16.mxu0 0
    %181 = vmatpush1.bf16.msra.mxu0 0
    %182 = vmatprep.subr.bf16.mxu0 0
    %183 = vmatpush1.bf16.msra.mxu0 0
    %184 = vmatprep.subr.bf16.mxu0 0
    %185 = vmatpush1.bf16.msra.mxu0 0
    %186 = vmatprep.subr.bf16.mxu0 0
    %187 = vmatpush1.bf16.msra.mxu0 0
    %188 = vmatprep.subr.bf16.mxu0 0
    %189 = vmatpush1.bf16.msra.mxu0 0
    %190 = vmatprep.mubr.bf16.mxu0 0
    %191 = vmatmul.mubr.bf16.gmra.mrb[0].mxu0 %v52
    %v192 = vpop.f32.mrb[0].mxu0
    %v193 = vadd.f32 0.0, %v192
    %v194 = vpop.f32.mrb[0].mxu0
    %v195 = vadd.f32 0.0, %v194
    %v196 = vpop.f32.mrb[0].mxu0
    %v197 = vpop.f32.mrb[0].mxu0
    %198 = vdwg.mxu0
    %v199 = vxor.u32 %v111, 2147483648
    %v200 = vxor.u32 %v113, 2147483648
    %v201 = vxor.u32 %v152, 2147483648
    %v202 = vxor.u32 %v154, 2147483648
    %v203 = vxor.u32 %v193, 2147483648
    %v204 = vxor.u32 %v195, 2147483648
    %v205 = vmul.f32 %v199, 1.442695
    %v206 = vpow.pop %v205
    %v207 = vmul.f32 %v200, 1.442695
    %v208 = vpow.pop %v207
    %v209 = vmul.f32 %v201, 1.442695
    %v210 = vpow.pop %v209
    %v211 = vmul.f32 %v202, 1.442695
    %v212 = vpow.pop %v211
    %v213 = vmul.f32 %v203, 1.442695
    %v214 = vpow.pop %v213
    %v215 = vmul.f32 %v204, 1.442695
    %v216 = vpow.pop %v215
    %v217 = vadd.f32 %v206, 1.0
    %v218 = vadd.f32 %v208, 1.0
    %v219 = vadd.f32 %v210, 1.0
    %v220 = vadd.f32 %v212, 1.0
    %v221 = vadd.f32 %v214, 1.0
    %v222 = vadd.f32 %v216, 1.0
    %v223 = vrcp.pop %v217
    %v224 = vmul.f32 1.0, %v223
    %v225 = vrcp.pop %v218
    %v226 = vmul.f32 1.0, %v225
    %v227 = vrcp.pop %v219
    %v228 = vmul.f32 1.0, %v227
    %v229 = vrcp.pop %v220
    %v230 = vmul.f32 1.0, %v229
    %v231 = vrcp.pop %v221
    %v232 = vmul.f32 1.0, %v231
    %v233 = vrcp.pop %v222
    %v234 = vmul.f32 1.0, %v233
    %v235 = vmul.f32 %v111, %v224
    %v236 = vmul.f32 %v113, %v226
    %v237 = vmul.f32 %v152, %v228
    %v238 = vmul.f32 %v154, %v230
    %v239 = vmul.f32 %v193, %v232
    %v240 = vmul.f32 %v195, %v234
    %v241 = vpack.c.bf16 %v235, %v235
    %v242 = vpack.c.bf16 %v236, %v236
    %v243 = vpack.c.bf16 %v237, %v237
    %v244 = vpack.c.bf16 %v238, %v238
    %v245 = vpack.c.bf16 %v239, %v239
    %v246 = vpack.c.bf16 %v240, %v240
    %247 = vrot.lane.b32.xlu0 %v235, 18
    %v248 = vpop.permute.xlu0 %247
    %249 = vrot.lane.b32.xlu0 %v236, 18
    %v250 = vpop.permute.xlu0 %249
    %251 = vrot.lane.b32.xlu0 %v237, 18
    %v252 = vpop.permute.xlu0 %251
    %253 = vrot.lane.b32.xlu0 %v238, 18
    %v254 = vpop.permute.xlu0 %253
    %255 = vrot.lane.b32.xlu0 %v239, 18
    %v256 = vpop.permute.xlu0 %255
    %257 = vrot.lane.b32.xlu0 %v240, 18
    %v258 = vpop.permute.xlu0 %257
    %v259 = vlaneseq
    %v260 = vand.u32 %v259, 127
    %vm261 = vcmp.lt.s32.totalorder %v260, 18
    %v262 = vsel %vm261, %v256, %v258
    %v263 = vsel %vm261, %v254, %v256
    %v264 = vsel %vm261, %v252, %v254
    %v265 = vsel %vm261, %v250, %v252
    %v266 = vsel %vm261, %v248, %v250
    %v267 = vsel %vm261, %v258, %v248
    %v268 = vpack.c.bf16 %v267, %v267
    %v269 = vpack.c.bf16 %v266, %v266
    %v270 = vpack.c.bf16 %v265, %v265
    %v271 = vpack.c.bf16 %v264, %v264
    %v272 = vpack.c.bf16 %v263, %v263
    %v273 = vpack.c.bf16 %v262, %v262
    %274 = vrot.lane.b32.xlu0 %v235, 17
    %v275 = vpop.permute.xlu0 %274
    %276 = vrot.lane.b32.xlu0 %v236, 17
    %v277 = vpop.permute.xlu0 %276
    %278 = vrot.lane.b32.xlu0 %v237, 17
    %v279 = vpop.permute.xlu0 %278
    %280 = vrot.lane.b32.xlu0 %v238, 17
    %v281 = vpop.permute.xlu0 %280
    %282 = vrot.lane.b32.xlu0 %v239, 17
    %v283 = vpop.permute.xlu0 %282
    %284 = vrot.lane.b32.xlu0 %v240, 17
    %v285 = vpop.permute.xlu0 %284
    %vm286 = vcmp.lt.s32.totalorder %v260, 17
    %v287 = vsel %vm286, %v283, %v285
    %v288 = vsel %vm286, %v281, %v283
    %v289 = vsel %vm286, %v279, %v281
    %v290 = vsel %vm286, %v277, %v279
    %v291 = vsel %vm286, %v275, %v277
    %v292 = vsel %vm286, %v285, %v275
    %v293 = vpack.c.bf16 %v292, %v292
    %v294 = vpack.c.bf16 %v291, %v291
    %v295 = vpack.c.bf16 %v290, %v290
    %v296 = vpack.c.bf16 %v289, %v289
    %v297 = vpack.c.bf16 %v288, %v288
    %v298 = vpack.c.bf16 %v287, %v287
    %299 = vrot.lane.b32.xlu0 %v235, 16
    %v300 = vpop.permute.xlu0 %299
    %301 = vrot.lane.b32.xlu0 %v236, 16
    %v302 = vpop.permute.xlu0 %301
    %303 = vrot.lane.b32.xlu0 %v237, 16
    %v304 = vpop.permute.xlu0 %303
    %305 = vrot.lane.b32.xlu0 %v238, 16
    %v306 = vpop.permute.xlu0 %305
    %307 = vrot.lane.b32.xlu0 %v239, 16
    %v308 = vpop.permute.xlu0 %307
    %309 = vrot.lane.b32.xlu0 %v240, 16
    %v310 = vpop.permute.xlu0 %309
    %vm311 = vcmp.lt.s32.totalorder %v260, 16
    %v312 = vsel %vm311, %v308, %v310
    %v313 = vsel %vm311, %v306, %v308
    %v314 = vsel %vm311, %v304, %v306
    %v315 = vsel %vm311, %v302, %v304
    %v316 = vsel %vm311, %v300, %v302
    %v317 = vsel %vm311, %v310, %v300
    %v318 = vpack.c.bf16 %v317, %v317
    %v319 = vpack.c.bf16 %v316, %v316
    %v320 = vpack.c.bf16 %v315, %v315
    %v321 = vpack.c.bf16 %v314, %v314
    %v322 = vpack.c.bf16 %v313, %v313
    %v323 = vpack.c.bf16 %v312, %v312
    %324 = vrot.lane.b32.xlu0 %v235, 1
    %v325 = vpop.permute.xlu0 %324
    %326 = vrot.lane.b32.xlu0 %v236, 1
    %v327 = vpop.permute.xlu0 %326
    %328 = vrot.lane.b32.xlu0 %v237, 1
    %v329 = vpop.permute.xlu0 %328
    %330 = vrot.lane.b32.xlu0 %v238, 1
    %v331 = vpop.permute.xlu0 %330
    %332 = vrot.lane.b32.xlu0 %v239, 1
    %v333 = vpop.permute.xlu0 %332
    %334 = vrot.lane.b32.xlu0 %v240, 1
    %v335 = vpop.permute.xlu0 %334
    %vm336 = vcmp.lt.s32.totalorder %v260, 1
    %v337 = vsel %vm336, %v333, %v335
    %v338 = vsel %vm336, %v331, %v333
    %v339 = vsel %vm336, %v329, %v331
    %v340 = vsel %vm336, %v327, %v329
    %v341 = vsel %vm336, %v325, %v327
    %v342 = vsel %vm336, %v335, %v325
    %v343 = vpack.c.bf16 %v342, %v342
    %v344 = vpack.c.bf16 %v341, %v341
    %v345 = vpack.c.bf16 %v340, %v340
    %v346 = vpack.c.bf16 %v339, %v339
    %v347 = vpack.c.bf16 %v338, %v338
    %v348 = vpack.c.bf16 %v337, %v337
    %349 = vrot.lane.b32.xlu0 %v235, 127
    %v350 = vpop.permute.xlu0 %349
    %351 = vrot.lane.b32.xlu0 %v236, 127
    %v352 = vpop.permute.xlu0 %351
    %353 = vrot.lane.b32.xlu0 %v237, 127
    %v354 = vpop.permute.xlu0 %353
    %355 = vrot.lane.b32.xlu0 %v238, 127
    %v356 = vpop.permute.xlu0 %355
    %357 = vrot.lane.b32.xlu0 %v239, 127
    %v358 = vpop.permute.xlu0 %357
    %359 = vrot.lane.b32.xlu0 %v240, 127
    %v360 = vpop.permute.xlu0 %359
    %vm361 = vcmp.lt.s32.totalorder %v260, 127
    %v362 = vsel %vm361, %v358, %v360
    %v363 = vsel %vm361, %v356, %v358
    %v364 = vsel %vm361, %v354, %v356
    %v365 = vsel %vm361, %v352, %v354
    %v366 = vsel %vm361, %v350, %v352
    %v367 = vsel %vm361, %v360, %v350
    %v368 = vpack.c.bf16 %v366, %v366
    %v369 = vpack.c.bf16 %v365, %v365
    %v370 = vpack.c.bf16 %v364, %v364
    %v371 = vpack.c.bf16 %v363, %v363
    %v372 = vpack.c.bf16 %v362, %v362
    %v373 = vpack.c.bf16 %v367, %v367
    %374 = vrot.lane.b32.xlu0 %v235, 112
    %v375 = vpop.permute.xlu0 %374
    %376 = vrot.lane.b32.xlu0 %v236, 112
    %v377 = vpop.permute.xlu0 %376
    %378 = vrot.lane.b32.xlu0 %v237, 112
    %v379 = vpop.permute.xlu0 %378
    %380 = vrot.lane.b32.xlu0 %v238, 112
    %v381 = vpop.permute.xlu0 %380
    %382 = vrot.lane.b32.xlu0 %v239, 112
    %v383 = vpop.permute.xlu0 %382
    %384 = vrot.lane.b32.xlu0 %v240, 112
    %v385 = vpop.permute.xlu0 %384
    %vm386 = vcmp.lt.s32.totalorder %v260, 112
    %v387 = vsel %vm386, %v383, %v385
    %v388 = vsel %vm386, %v381, %v383
    %v389 = vsel %vm386, %v379, %v381
    %v390 = vsel %vm386, %v377, %v379
    %v391 = vsel %vm386, %v375, %v377
    %v392 = vsel %vm386, %v385, %v375
    %v393 = vpack.c.bf16 %v391, %v391
    %v394 = vpack.c.bf16 %v390, %v390
    %v395 = vpack.c.bf16 %v389, %v389
    %v396 = vpack.c.bf16 %v388, %v388
    %v397 = vpack.c.bf16 %v387, %v387
    %v398 = vpack.c.bf16 %v392, %v392
    %399 = vrot.lane.b32.xlu0 %v235, 111
    %v400 = vpop.permute.xlu0 %399
    %401 = vrot.lane.b32.xlu0 %v236, 111
    %v402 = vpop.permute.xlu0 %401
    %403 = vrot.lane.b32.xlu0 %v237, 111
    %v404 = vpop.permute.xlu0 %403
    %405 = vrot.lane.b32.xlu0 %v238, 111
    %v406 = vpop.permute.xlu0 %405
    %407 = vrot.lane.b32.xlu0 %v239, 111
    %v408 = vpop.permute.xlu0 %407
    %409 = vrot.lane.b32.xlu0 %v240, 111
    %v410 = vpop.permute.xlu0 %409
    %vm411 = vcmp.lt.s32.totalorder %v260, 111
    %v412 = vsel %vm411, %v408, %v410
    %v413 = vsel %vm411, %v406, %v408
    %v414 = vsel %vm411, %v404, %v406
    %v415 = vsel %vm411, %v402, %v404
    %v416 = vsel %vm411, %v400, %v402
    %v417 = vsel %vm411, %v410, %v400
    %v418 = vpack.c.bf16 %v416, %v416
    %v419 = vpack.c.bf16 %v415, %v415
    %v420 = vpack.c.bf16 %v414, %v414
    %v421 = vpack.c.bf16 %v413, %v413
    %v422 = vpack.c.bf16 %v412, %v412
    %v423 = vpack.c.bf16 %v417, %v417
    %424 = vrot.lane.b32.xlu0 %v235, 110
    %v425 = vpop.permute.xlu0 %424
    %426 = vrot.lane.b32.xlu0 %v236, 110
    %v427 = vpop.permute.xlu0 %426
    %428 = vrot.lane.b32.xlu0 %v237, 110
    %v429 = vpop.permute.xlu0 %428
    %430 = vrot.lane.b32.xlu0 %v238, 110
    %v431 = vpop.permute.xlu0 %430
    %432 = vrot.lane.b32.xlu0 %v239, 110
    %v433 = vpop.permute.xlu0 %432
    %434 = vrot.lane.b32.xlu0 %v240, 110
    %v435 = vpop.permute.xlu0 %434
    %vm436 = vcmp.lt.s32.totalorder %v260, 110
    %v437 = vsel %vm436, %v433, %v435
    %v438 = vsel %vm436, %v431, %v433
    %v439 = vsel %vm436, %v429, %v431
    %v440 = vsel %vm436, %v427, %v429
    %v441 = vsel %vm436, %v425, %v427
    %v442 = vsel %vm436, %v435, %v425
    %v443 = vpack.c.bf16 %v441, %v441
    %v444 = vpack.c.bf16 %v440, %v440
    %v445 = vpack.c.bf16 %v439, %v439
    %v446 = vpack.c.bf16 %v438, %v438
    %v447 = vpack.c.bf16 %v437, %v437
    %v448 = vpack.c.bf16 %v442, %v442
    %v455 = vrot.slane %v293, 4
    %v456 = vrot.slane %v294, 4
    %v457 = vrot.slane %v295, 4
    %v458 = vrot.slane %v296, 4
    %v459 = vrot.slane %v297, 4
    %v460 = vrot.slane %v298, 4
    %v467 = vrot.slane %v343, 4
    %v468 = vrot.slane %v344, 4
    %v469 = vrot.slane %v345, 4
    %v470 = vrot.slane %v346, 4
    %v471 = vrot.slane %v347, 4
    %v472 = vrot.slane %v348, 4
    %v479 = vrot.slane %v368, 4
    %v480 = vrot.slane %v369, 4
    %v481 = vrot.slane %v370, 4
    %v482 = vrot.slane %v371, 4
    %v483 = vrot.slane %v372, 4
    %v484 = vrot.slane %v373, 4
    %v491 = vrot.slane %v418, 4
    %v492 = vrot.slane %v419, 4
    %v493 = vrot.slane %v420, 4
    %v494 = vrot.slane %v421, 4
    %v495 = vrot.slane %v422, 4
    %v496 = vrot.slane %v423, 4
    %vm497 = vcmask 1043456
    %v500 = vsel %vm497, %v268, %v455
    %v504 = vsel %vm497, %v269, %v456
    %v508 = vsel %vm497, %v270, %v457
    %v512 = vsel %vm497, %v271, %v458
    %v516 = vsel %vm497, %v272, %v459
    %v520 = vsel %vm497, %v273, %v460
    %v524 = vsel %vm497, %v318, %v467
    %v528 = vsel %vm497, %v319, %v468
    %v532 = vsel %vm497, %v320, %v469
    %v536 = vsel %vm497, %v321, %v470
    %v540 = vsel %vm497, %v322, %v471
    %v544 = vsel %vm497, %v323, %v472
    %v548 = vsel %vm497, %v241, %v479
    %v552 = vsel %vm497, %v242, %v480
    %v556 = vsel %vm497, %v243, %v481
    %v560 = vsel %vm497, %v244, %v482
    %v564 = vsel %vm497, %v245, %v483
    %v568 = vsel %vm497, %v246, %v484
    %v572 = vsel %vm497, %v393, %v491
    %v576 = vsel %vm497, %v394, %v492
    %v580 = vsel %vm497, %v395, %v493
    %v584 = vsel %vm497, %v396, %v494
    %v588 = vsel %vm497, %v397, %v495
    %v592 = vsel %vm497, %v398, %v496
    %v594 = vld [vmem:[%s2] sm:$0xf]
    %v595 = vld [vmem:[%s3] sm:$0xff]
    %597 = vset.pattern.permute.xlu0 0
    %598 = vperm.xlu0 %597, %v595
    %v599 = vpop.permute.xlu0 %598
    %vm601 = vcmask 588800
    %v603 = vsel %vm601, %v594, 0
    %v606 = vsel %vm497, %v443, 0
    %v609 = vsel %vm497, %v444, 0
    %v612 = vsel %vm497, %v445, 0
    %v615 = vsel %vm497, %v446, 0
    %v618 = vsel %vm497, %v447, 0
    %v621 = vsel %vm497, %v448, 0
    %623 = vmatprep.subr.bf16.mxu0 %v504
    %624 = vmatpush1.bf16.msra.mxu0 %v500
    %625 = vmatprep.subr.bf16.mxu0 %v528
    %626 = vmatpush1.bf16.msra.mxu0 %v524
    %627 = vmatprep.subr.bf16.mxu0 %v552
    %628 = vmatpush1.bf16.msra.mxu0 %v548
    %629 = vmatprep.subr.bf16.mxu0 %v576
    %630 = vmatpush1.bf16.msra.mxu0 %v572
    %631 = vmatprep.subr.bf16.mxu0 %v609
    %632 = vmatpush1.bf16.msra.mxu0 %v606
    %633 = vmatprep.subr.bf16.mxu0 0
    %634 = vmatpush1.bf16.msra.mxu0 0
    %635 = vmatprep.subr.bf16.mxu0 0
    %636 = vmatpush1.bf16.msra.mxu0 0
    %637 = vmatprep.subr.bf16.mxu0 0
    %638 = vmatpush1.bf16.msra.mxu0 0
    %639 = vmatprep.subr.bf16.mxu0 0
    %640 = vmatpush1.bf16.msra.mxu0 0
    %641 = vmatprep.subr.bf16.mxu0 0
    %642 = vmatpush1.bf16.msra.mxu0 0
    %643 = vmatprep.subr.bf16.mxu0 0
    %644 = vmatpush1.bf16.msra.mxu0 0
    %645 = vmatprep.subr.bf16.mxu0 0
    %646 = vmatpush1.bf16.msra.mxu0 0
    %647 = vmatprep.subr.bf16.mxu0 0
    %648 = vmatpush1.bf16.msra.mxu0 0
    %649 = vmatprep.subr.bf16.mxu0 0
    %650 = vmatpush1.bf16.msra.mxu0 0
    %651 = vmatprep.subr.bf16.mxu0 0
    %652 = vmatpush1.bf16.msra.mxu0 0
    %653 = vmatprep.subr.bf16.mxu0 0
    %654 = vmatpush1.bf16.msra.mxu0 0
    %655 = vmatprep.mubr.bf16.mxu0 0
    %656 = vmatmul.mubr.bf16.gmra.mrb[0].mxu0 %v603
    %v657 = vpop.f32.mrb[0].mxu0
    %v658 = vadd.f32 %v599, %v657
    %v659 = vpop.f32.mrb[0].mxu0
    %v660 = vadd.f32 %v599, %v659
    %v661 = vpop.f32.mrb[0].mxu0
    %v662 = vpop.f32.mrb[0].mxu0
    %663 = vdwg.mxu0
    %664 = vmatprep.subr.bf16.mxu0 %v512
    %665 = vmatpush1.bf16.msra.mxu0 %v508
    %666 = vmatprep.subr.bf16.mxu0 %v536
    %667 = vmatpush1.bf16.msra.mxu0 %v532
    %668 = vmatprep.subr.bf16.mxu0 %v560
    %669 = vmatpush1.bf16.msra.mxu0 %v556
    %670 = vmatprep.subr.bf16.mxu0 %v584
    %671 = vmatpush1.bf16.msra.mxu0 %v580
    %672 = vmatprep.subr.bf16.mxu0 %v615
    %673 = vmatpush1.bf16.msra.mxu0 %v612
    %674 = vmatprep.subr.bf16.mxu0 0
    %675 = vmatpush1.bf16.msra.mxu0 0
    %676 = vmatprep.subr.bf16.mxu0 0
    %677 = vmatpush1.bf16.msra.mxu0 0
    %678 = vmatprep.subr.bf16.mxu0 0
    %679 = vmatpush1.bf16.msra.mxu0 0
    %680 = vmatprep.subr.bf16.mxu0 0
    %681 = vmatpush1.bf16.msra.mxu0 0
    %682 = vmatprep.subr.bf16.mxu0 0
    %683 = vmatpush1.bf16.msra.mxu0 0
    %684 = vmatprep.subr.bf16.mxu0 0
    %685 = vmatpush1.bf16.msra.mxu0 0
    %686 = vmatprep.subr.bf16.mxu0 0
    %687 = vmatpush1.bf16.msra.mxu0 0
    %688 = vmatprep.subr.bf16.mxu0 0
    %689 = vmatpush1.bf16.msra.mxu0 0
    %690 = vmatprep.subr.bf16.mxu0 0
    %691 = vmatpush1.bf16.msra.mxu0 0
    %692 = vmatprep.subr.bf16.mxu0 0
    %693 = vmatpush1.bf16.msra.mxu0 0
    %694 = vmatprep.subr.bf16.mxu0 0
    %695 = vmatpush1.bf16.msra.mxu0 0
    %696 = vmatprep.mubr.bf16.mxu0 0
    %697 = vmatmul.mubr.bf16.gmra.mrb[0].mxu0 %v603
    %v698 = vpop.f32.mrb[0].mxu0
    %v699 = vadd.f32 %v599, %v698
    %v700 = vpop.f32.mrb[0].mxu0
    %v701 = vadd.f32 %v599, %v700
    %v702 = vpop.f32.mrb[0].mxu0
    %v703 = vpop.f32.mrb[0].mxu0
    %704 = vdwg.mxu0
    %705 = vmatprep.subr.bf16.mxu0 %v520
    %706 = vmatpush1.bf16.msra.mxu0 %v516
    %707 = vmatprep.subr.bf16.mxu0 %v544
    %708 = vmatpush1.bf16.msra.mxu0 %v540
    %709 = vmatprep.subr.bf16.mxu0 %v568
    %710 = vmatpush1.bf16.msra.mxu0 %v564
    %711 = vmatprep.subr.bf16.mxu0 %v592
    %712 = vmatpush1.bf16.msra.mxu0 %v588
    %713 = vmatprep.subr.bf16.mxu0 %v621
    %714 = vmatpush1.bf16.msra.mxu0 %v618
    %715 = vmatprep.subr.bf16.mxu0 0
    %716 = vmatpush1.bf16.msra.mxu0 0
    %717 = vmatprep.subr.bf16.mxu0 0
    %718 = vmatpush1.bf16.msra.mxu0 0
    %719 = vmatprep.subr.bf16.mxu0 0
    %720 = vmatpush1.bf16.msra.mxu0 0
    %721 = vmatprep.subr.bf16.mxu0 0
    %722 = vmatpush1.bf16.msra.mxu0 0
    %723 = vmatprep.subr.bf16.mxu0 0
    %724 = vmatpush1.bf16.msra.mxu0 0
    %725 = vmatprep.subr.bf16.mxu0 0
    %726 = vmatpush1.bf16.msra.mxu0 0
    %727 = vmatprep.subr.bf16.mxu0 0
    %728 = vmatpush1.bf16.msra.mxu0 0
    %729 = vmatprep.subr.bf16.mxu0 0
    %730 = vmatpush1.bf16.msra.mxu0 0
    %731 = vmatprep.subr.bf16.mxu0 0
    %732 = vmatpush1.bf16.msra.mxu0 0
    %733 = vmatprep.subr.bf16.mxu0 0
    %734 = vmatpush1.bf16.msra.mxu0 0
    %735 = vmatprep.subr.bf16.mxu0 0
    %736 = vmatpush1.bf16.msra.mxu0 0
    %737 = vmatprep.mubr.bf16.mxu0 0
    %738 = vmatmul.mubr.bf16.gmra.mrb[0].mxu0 %v603
    %v739 = vpop.f32.mrb[0].mxu0
    %v740 = vadd.f32 %v599, %v739
    %v741 = vpop.f32.mrb[0].mxu0
    %v742 = vadd.f32 %v599, %v741
    %v743 = vpop.f32.mrb[0].mxu0
    %v744 = vpop.f32.mrb[0].mxu0
    %745 = vdwg.mxu0
    %v746 = vxor.u32 %v658, 2147483648
    %v747 = vxor.u32 %v660, 2147483648
    %v748 = vxor.u32 %v699, 2147483648
    %v749 = vxor.u32 %v701, 2147483648
    %v750 = vxor.u32 %v740, 2147483648
    %v751 = vxor.u32 %v742, 2147483648
    %v752 = vmul.f32 %v746, 1.442695
    %v753 = vpow.pop %v752
    %v754 = vmul.f32 %v747, 1.442695
    %v755 = vpow.pop %v754
    %v756 = vmul.f32 %v748, 1.442695
    %v757 = vpow.pop %v756
    %v758 = vmul.f32 %v749, 1.442695
    %v759 = vpow.pop %v758
    %v760 = vmul.f32 %v750, 1.442695
    %v761 = vpow.pop %v760
    %v762 = vmul.f32 %v751, 1.442695
    %v763 = vpow.pop %v762
    %v764 = vadd.f32 %v753, 1.0
    %v765 = vadd.f32 %v755, 1.0
    %v766 = vadd.f32 %v757, 1.0
    %v767 = vadd.f32 %v759, 1.0
    %v768 = vadd.f32 %v761, 1.0
    %v769 = vadd.f32 %v763, 1.0
    %v770 = vrcp.pop %v764
    %v771 = vmul.f32 1.0, %v770
    %v772 = vrcp.pop %v765
    %v773 = vmul.f32 1.0, %v772
    %v774 = vrcp.pop %v766
    %v775 = vmul.f32 1.0, %v774
    %v776 = vrcp.pop %v767
    %v777 = vmul.f32 1.0, %v776
    %v778 = vrcp.pop %v768
    %v779 = vmul.f32 1.0, %v778
    %v780 = vrcp.pop %v769
    %v781 = vmul.f32 1.0, %v780
    %v782 = vmul.f32 %v658, %v771
    %v783 = vmul.f32 %v660, %v773
    %v784 = vmul.f32 %v699, %v775
    %v785 = vmul.f32 %v701, %v777
    %v786 = vmul.f32 %v740, %v779
    %v787 = vmul.f32 %v742, %v781
    %v788 = vadd.f32 %v782, %v235
    %v789 = vadd.f32 %v783, %v236
    %v790 = vadd.f32 %v784, %v237
    %v791 = vadd.f32 %v785, %v238
    %v792 = vadd.f32 %v786, %v239
    %v793 = vadd.f32 %v787, %v240
    %794 = vst [vmem:[#allocation5] sm:$0xff] %v788
    %795 = vst [vmem:[#allocation5 + $0x8] sm:$0xff] %v789
    %796 = vst [vmem:[#allocation5 + $0x10] sm:$0xff] %v790
    %797 = vst [vmem:[#allocation5 + $0x18] sm:$0xff] %v791
    %798 = vst [vmem:[#allocation5 + $0x20] sm:$0xff] %v792
    %799 = vst [vmem:[#allocation5 + $0x28] sm:$0xff] %v793
    // Predicated region
    $region22: #{tpu_custom_call.1} parent=1 // pred_check
      _
    $region23: #{tpu_custom_call.1} parent=1 // pred_check_branch
      %801 = sbr.rel (0) target = $region25
    $region24: #{tpu_custom_call.1} parent=1 // pred_region
      %s803 = ssub.s32 768, 768
      %804 = vsyncadd [#allocation4], %s803
      %s806 = sshll.u32 [#allocation5], 4
      %s807 = int_to_ptr.vmem [resolvable:$true] %s806
      %809 = dma.vmem_to_hbm [thread:$0]  %s807, 768, %s4, [#allocation4]
    $region25: #{tpu_custom_call.1} parent=1 // pred_fallthru
      _
    // Predicated region
    $region26: #{tpu_custom_call.1} parent=1 // pred_check
      _
    $region27: #{tpu_custom_call.1} parent=1 // pred_check_branch
      %811 = sbr.rel (0) target = $region29
    $region28: #{tpu_custom_call.1} parent=1 // pred_region
      %812 = dma.done [#allocation4], 768
    $region29: #{tpu_custom_call.1} parent=1 // pred_fallthru
      _
    %813 = vsyncpa [#allocation3], 1
    %814 = vsyncpa [#allocation4], 1

</llo_original>
